<compile_context>
chip_gen: v7x
topology: tpu7x:2x2x1
jax: 0.10.0
libtpu: 0.0.40
codegen_flags: <defaults>
</compile_context>

<pallas_src>
import functools

import jax
import jax.numpy as jnp
from jax.experimental import pallas as pl
from jax.experimental.pallas import tpu as pltpu

CHN_MID = 32
EPS = 0.1
P_TILE = 16384    # default pixel tile (multiple of 128); working set well under 32 MiB


def _round_up(x, m):
    return ((x + m - 1) // m) * m


def _make_kernel(tile, n_valid):
    """Kernel closure over the static tile width and true pixel count."""

    def kernel(d0_ref, d1_ref, j_ref,
               w1_ref, w2_ref, b2_ref, w3_ref, b3_ref,
               out_ref, feat_ref):
        d0 = d0_ref[...]                       # (1, tile) f32
        d1 = d1_ref[...]
        per = (j_ref[...] + 1.0) * 0.5         # target in [0, 1]

        # Build features in the persistent VMEM scratch, row by row.
        feat_ref[0:1, :] = d0
        feat_ref[1:2, :] = d1
        feat_ref[2:3, :] = d0 - d1
        feat_ref[3:4, :] = d0 / (d1 + EPS)     # exact divides (parity with torch)
        feat_ref[4:5, :] = d1 / (d0 + EPS)
        # Row 5 multiplies the folded conv1 bias column; rows 6-7 hit zero
        # weight columns but must stay finite.  Rewritten every step (cheap,
        # store-slot only) so the kernel is megacore-safe.
        feat_ref[5:6, :] = jnp.ones((1, tile), jnp.float32)
        feat_ref[6:8, :] = jnp.zeros((2, tile), jnp.float32)

        feat = feat_ref[...].astype(jnp.bfloat16)          # (8, tile) bf16

        # conv1 (5->32, K padded to 8, bias folded) + LeakyReLU(0.2)
        h = jnp.dot(w1_ref[...], feat, preferred_element_type=jnp.float32)
        h = jnp.maximum(h, 0.2 * h)
        # conv2 (32->32) + bias + LeakyReLU(0.2)
        h = jnp.dot(w2_ref[...], h.astype(jnp.bfloat16),
                    preferred_element_type=jnp.float32)
        h = h + b2_ref[...]
        h = jnp.maximum(h, 0.2 * h)
        # conv3 (32->1)  -> logits z, shape (1, tile)
        z = jnp.dot(w3_ref[...], h.astype(jnp.bfloat16),
                    preferred_element_type=jnp.float32)
        z = z + b3_ref[...]

        # BCE in logits form (== sigmoid + BCELoss with torch's -100 log clamp):
        #   log(sigmoid(z))   = -softplus(-z)
        #   log(1-sigmoid(z)) = -softplus(z) = -(z + softplus(-z))
        # (log(1+x) here is fine: where 1+x could lose precision, |z| dominates
        #  the max(-z,0) term, so log1p gains nothing measurable.)
        sp_neg = jnp.maximum(-z, 0.0) + jnp.log(1.0 + jnp.exp(-jnp.abs(z)))
        sp_pos = z + sp_neg
        log_p = -jnp.minimum(sp_neg, 100.0)
        log_1mp = -jnp.minimum(sp_pos, 100.0)
        bce = -(per * log_p + (1.0 - per) * log_1mp)       # (1, tile)

        pid = pl.program_id(0)
        last = pl.num_programs(0) - 1
        lane = jax.lax.broadcasted_iota(jnp.int32, (1, 128), 1)

        # Only the last tile can contain padded pixels -> only it pays for the mask.
        @pl.when(pid == last)
        def _():
            gidx = pid * tile + jax.lax.broadcasted_iota(jnp.int32, (1, tile), 1)
            part = jnp.sum(jnp.where(gidx < n_valid, bce, 0.0))
            out_ref[...] = jnp.where(lane == 0, part, 0.0)

        @pl.when(pid != last)
        def _():
            part = jnp.sum(bce)
            out_ref[...] = jnp.where(lane == 0, part, 0.0)

    return kernel


def init_params(key, chn_mid=CHN_MID):
    """Synthetic Dist2LogitLayer params, stored in (out_ch, in_ch) matmul form."""
    k1, k2, k3, k4, k5, k6 = jax.random.split(key, 6)
    w1 = jax.random.normal(k1, (chn_mid, 5), jnp.float32) * 0.3        # conv1.weight
    b1 = jax.random.normal(k2, (chn_mid, 1), jnp.float32) * 0.1        # conv1.bias
    w2 = jax.random.normal(k3, (chn_mid, chn_mid), jnp.float32) * 0.1  # conv2.weight
    b2 = jax.random.normal(k4, (chn_mid, 1), jnp.float32) * 0.1        # conv2.bias
    w3 = jax.random.normal(k5, (1, chn_mid), jnp.float32) * 0.1        # conv3.weight
    b3 = jax.random.normal(k6, (1, 1), jnp.float32) * 0.1              # conv3.bias
    return w1, b1, w2, b2, w3, b3


@functools.partial(jax.jit, static_argnames=("p_tile",))
def bce_ranking_loss(d0, d1, judge, params, *, p_tile=P_TILE):
    """d0, d1: NCHW with C == 1; judge broadcastable to d0.  Returns scalar loss."""
    w1, b1, w2, b2, w3, b3 = params
    assert d0.shape[1] == 1
    judge = jnp.broadcast_to(judge, d0.shape)   # handles per-sample (N,1,1,1) judge
    p = d0.size
    chn = w1.shape[0]

    p_tile = max(128, (p_tile // 128) * 128)
    p128 = _round_up(p, 128)
    # Cap the tile so there are >=2 grid steps whenever P > 128: the "parallel"
    # axis then shards across both v7x TensorCores instead of leaving one idle.
    tile = min(p_tile, _round_up((p128 + 1) // 2, 128))
    p_pad = _round_up(p, tile)
    num_tiles = p_pad // tile

    def prep(x):
        x = x.reshape(1, p).astype(jnp.float32)
        if p_pad != p:
            x = jnp.pad(x, ((0, 0), (0, p_pad - p)))
        return x

    d0f, d1f, jf = prep(d0), prep(d1), prep(judge)

    # conv1 weight padded to K=8 with the bias folded into column 5
    # (feature row 5 is all-ones); columns 6-7 are zero.  Weights cast to bf16
    # once here; biases b2/b3 stay f32 (added in f32 inside the kernel).
    w1p = jnp.concatenate(
        [w1, b1, jnp.zeros((chn, 2), jnp.float32)], axis=1).astype(jnp.bfloat16)
    w2b = w2.astype(jnp.bfloat16)
    w3b = w3.astype(jnp.bfloat16)

    stream_spec = pl.BlockSpec((1, tile), lambda i: (0, i))
    weight_specs = [pl.BlockSpec(w.shape, lambda i: (0, 0))
                    for w in (w1p, w2b, b2, w3b, b3)]

    flops_per_px = 2 * (8 * chn + chn * chn + chn) + 48
    cost = pl.CostEstimate(
        flops=int(p_pad) * flops_per_px,
        transcendentals=2 * int(p_pad),
        bytes_accessed=12 * int(p_pad)
        + 2 * int(w1p.size + w2b.size + w3b.size)
        + 4 * int(b2.size + b3.size)
        + 4 * 128 * num_tiles,
    )

    partials = pl.pallas_call(
        _make_kernel(tile, p),
        out_shape=jax.ShapeDtypeStruct((1, num_tiles * 128), jnp.float32),
        grid_spec=pltpu.PrefetchScalarGridSpec(
            num_scalar_prefetch=0,
            grid=(num_tiles,),
            in_specs=[stream_spec, stream_spec, stream_spec] + weight_specs,
            out_specs=pl.BlockSpec((1, 128), lambda i: (0, i)),
            scratch_shapes=[pltpu.VMEM((8, tile), jnp.float32)],
        ),
        compiler_params=pltpu.CompilerParams(
            dimension_semantics=("parallel",),
            vmem_limit_bytes=32 * 1024 * 1024,   # small actual need; safe on v7x (64 MiB/TC)
        ),
        cost_estimate=cost,
    )(d0f, d1f, jf, w1p, w2b, b2, w3b, b3)

    # TODO(synk): on v5e the streamed inputs could be stored as bf16 in HBM and
    # upcast in-kernel to halve input bytes; DMA is not the binding slot on
    # v6e/v7x, so kept f32.
    return jnp.sum(partials) / p


def _reference(d0, d1, judge, params):
    """Pure-JAX f32 reference of the PyTorch forward (sigmoid + clamped-log BCE)."""
    w1, b1, w2, b2, w3, b3 = params
    p = d0.size
    d0f = d0.reshape(1, p).astype(jnp.float32)
    d1f = d1.reshape(1, p).astype(jnp.float32)
    per = (jnp.broadcast_to(judge, d0.shape).reshape(1, p).astype(jnp.float32) + 1.0) / 2.0
    feat = jnp.concatenate(
        [d0f, d1f, d0f - d1f, d0f / (d1f + EPS), d1f / (d0f + EPS)], axis=0)
    x = w1 @ feat + b1
    x = jnp.where(x > 0, x, 0.2 * x)
    x = w2 @ x + b2
    x = jnp.where(x > 0, x, 0.2 * x)
    logit = jax.nn.sigmoid(w3 @ x + b3)
    bce = -(per * jnp.clip(jnp.log(logit), -100.0, None)
            + (1.0 - per) * jnp.clip(jnp.log(1.0 - logit), -100.0, None))
    return jnp.mean(bce)


if __name__ == "__main__":
    key = jax.random.PRNGKey(0)
    kp, k0, k1, kj, k0b, k1b, kjb = jax.random.split(key, 7)

    params = init_params(kp)

    # Case 1: N=2, C=1, H=W=16 -> P=512 pixels (split into 2 tiles by the
    # >=2-grid-steps rule; exercises the multi-tile parallel path).
    N, C, H, W = 2, 1, 16, 16
    d0 = jax.random.uniform(k0, (N, C, H, W), jnp.float32, 0.0, 2.0)
    d1 = jax.random.uniform(k1, (N, C, H, W), jnp.float32, 0.0, 2.0)
    judge = jax.random.uniform(kj, (N, C, H, W), jnp.float32, -1.0, 1.0)

    loss = bce_ranking_loss(d0, d1, judge, params)
    jax.block_until_ready(loss)
    ref = _reference(d0, d1, judge, params)
    # Tolerance is loose only because the MXU matmuls use bf16 operands.
    assert jnp.allclose(loss, ref, rtol=2e-2, atol=2e-2), (loss, ref)

    # Same inputs, forced 4-tile grid (tiles of 128) -> deeper pipelined path.
    loss_mt = bce_ranking_loss(d0, d1, judge, params, p_tile=128)
    jax.block_until_ready(loss_mt)
    assert jnp.allclose(loss_mt, ref, rtol=2e-2, atol=2e-2), (loss_mt, ref)

    # Case 2: P=162 (not a multiple of 128) -> exercises the last-tile padding
    # mask + true-count mean.
    N2, H2, W2 = 2, 9, 9
    d0b = jax.random.uniform(k0b, (N2, 1, H2, W2), jnp.float32, 0.0, 2.0)
    d1b = jax.random.uniform(k1b, (N2, 1, H2, W2), jnp.float32, 0.0, 2.0)
    judgeb = jax.random.uniform(kjb, (N2, 1, H2, W2), jnp.float32, -1.0, 1.0)

    loss_b = bce_ranking_loss(d0b, d1b, judgeb, params, p_tile=128)
    jax.block_until_ready(loss_b)
    ref_b = _reference(d0b, d1b, judgeb, params)
    assert jnp.allclose(loss_b, ref_b, rtol=2e-2, atol=2e-2), (loss_b, ref_b)

    # Case 3: per-sample judge of shape (N,1,1,1) -> broadcast path.
    judge_ps = judge[:, :, :1, :1]
    loss_ps = bce_ranking_loss(d0, d1, judge_ps, params)
    jax.block_until_ready(loss_ps)
    ref_ps = _reference(d0, d1, judge_ps, params)
    assert jnp.allclose(loss_ps, ref_ps, rtol=2e-2, atol=2e-2), (loss_ps, ref_ps)

    print("KERNEL_OK")
</pallas_src>

<mosaic_0001>
module attributes {stable_mosaic.version = 11 : i64} {
  func.func @kernel(%arg0: i32, %arg1: memref<1x256xf32, #tpu.memory_space<vmem>>, %arg2: memref<1x256xf32, #tpu.memory_space<vmem>>, %arg3: memref<1x256xf32, #tpu.memory_space<vmem>>, %arg4: memref<32x8xbf16, #tpu.memory_space<vmem>>, %arg5: memref<32x32xbf16, #tpu.memory_space<vmem>>, %arg6: memref<32x1xf32, #tpu.memory_space<vmem>>, %arg7: memref<1x32xbf16, #tpu.memory_space<vmem>>, %arg8: memref<1x1xf32, #tpu.memory_space<vmem>>, %arg9: memref<1x128xf32, #tpu.memory_space<vmem>>, %arg10: memref<8x256xf32, #tpu.memory_space<vmem>>) attributes {dimension_semantics = [#tpu.dimension_semantics<parallel>], iteration_bounds = array<i64: 2>, scalar_prefetch = 0 : i64, scratch_operands = 1 : i64, tpu.core_type = #tpu.core_type<tc>, window_params = [{transform_indices = @transform_0, window_bounds = array<i64: 1, 256>}, {transform_indices = @transform_1, window_bounds = array<i64: 1, 256>}, {transform_indices = @transform_2, window_bounds = array<i64: 1, 256>}, {pipeline_mode = #tpu.pipeline_mode<synchronous>, transform_indices = @transform_3, window_bounds = array<i64: 32, 8>}, {pipeline_mode = #tpu.pipeline_mode<synchronous>, transform_indices = @transform_4, window_bounds = array<i64: 32, 32>}, {pipeline_mode = #tpu.pipeline_mode<synchronous>, transform_indices = @transform_5, window_bounds = array<i64: 32, 1>}, {pipeline_mode = #tpu.pipeline_mode<synchronous>, transform_indices = @transform_6, window_bounds = array<i64: 1, 32>}, {pipeline_mode = #tpu.pipeline_mode<synchronous>, transform_indices = @transform_7, window_bounds = array<i64: 1, 1>}, {transform_indices = @transform_8, window_bounds = array<i64: 1, 128>}]} {
    %c0 = arith.constant 0 : index
    %c0_0 = arith.constant 0 : index
    %0 = vector.load %arg1[%c0, %c0_0] : memref<1x256xf32, #tpu.memory_space<vmem>>, vector<1x256xf32>
    %c0_1 = arith.constant 0 : index
    %c0_2 = arith.constant 0 : index
    %1 = vector.load %arg2[%c0_1, %c0_2] : memref<1x256xf32, #tpu.memory_space<vmem>>, vector<1x256xf32>
    %c0_3 = arith.constant 0 : index
    %c0_4 = arith.constant 0 : index
    %2 = vector.load %arg3[%c0_3, %c0_4] : memref<1x256xf32, #tpu.memory_space<vmem>>, vector<1x256xf32>
    %cst = arith.constant 1.000000e+00 : f32
    %3 = vector.broadcast %cst : f32 to vector<1x256xf32>
    %4 = arith.addf %2, %3 : vector<1x256xf32>
    %cst_5 = arith.constant 5.000000e-01 : f32
    %5 = vector.broadcast %cst_5 : f32 to vector<1x256xf32>
    %6 = arith.mulf %4, %5 : vector<1x256xf32>
    %c0_6 = arith.constant 0 : index
    %c0_7 = arith.constant 0 : index
    %7 = vector.load %arg10[%c0_6, %c0_7] : memref<8x256xf32, #tpu.memory_space<vmem>>, vector<1x256xf32>
    tpu.vector_store %arg10[%c0_6, %c0_7], %0 {strides = array<i32>} : memref<8x256xf32, #tpu.memory_space<vmem>>, vector<1x256xf32>,
    %c1 = arith.constant 1 : index
    %c0_8 = arith.constant 0 : index
    %8 = vector.load %arg10[%c1, %c0_8] : memref<8x256xf32, #tpu.memory_space<vmem>>, vector<1x256xf32>
    tpu.vector_store %arg10[%c1, %c0_8], %1 {strides = array<i32>} : memref<8x256xf32, #tpu.memory_space<vmem>>, vector<1x256xf32>,
    %9 = arith.subf %0, %1 : vector<1x256xf32>
    %c2 = arith.constant 2 : index
    %c0_9 = arith.constant 0 : index
    %10 = vector.load %arg10[%c2, %c0_9] : memref<8x256xf32, #tpu.memory_space<vmem>>, vector<1x256xf32>
    tpu.vector_store %arg10[%c2, %c0_9], %9 {strides = array<i32>} : memref<8x256xf32, #tpu.memory_space<vmem>>, vector<1x256xf32>,
    %cst_10 = arith.constant 1.000000e-01 : f32
    %11 = vector.broadcast %cst_10 : f32 to vector<1x256xf32>
    %12 = arith.addf %1, %11 : vector<1x256xf32>
    %13 = arith.divf %0, %12 : vector<1x256xf32>
    %c3 = arith.constant 3 : index
    %c0_11 = arith.constant 0 : index
    %14 = vector.load %arg10[%c3, %c0_11] : memref<8x256xf32, #tpu.memory_space<vmem>>, vector<1x256xf32>
    tpu.vector_store %arg10[%c3, %c0_11], %13 {strides = array<i32>} : memref<8x256xf32, #tpu.memory_space<vmem>>, vector<1x256xf32>,
    %cst_12 = arith.constant 1.000000e-01 : f32
    %15 = vector.broadcast %cst_12 : f32 to vector<1x256xf32>
    %16 = arith.addf %0, %15 : vector<1x256xf32>
    %17 = arith.divf %1, %16 : vector<1x256xf32>
    %c4 = arith.constant 4 : index
    %c0_13 = arith.constant 0 : index
    %18 = vector.load %arg10[%c4, %c0_13] : memref<8x256xf32, #tpu.memory_space<vmem>>, vector<1x256xf32>
    tpu.vector_store %arg10[%c4, %c0_13], %17 {strides = array<i32>} : memref<8x256xf32, #tpu.memory_space<vmem>>, vector<1x256xf32>,
    %cst_14 = arith.constant 1.000000e+00 : f32
    %19 = vector.broadcast %cst_14 : f32 to vector<1x256xf32>
    %c5 = arith.constant 5 : index
    %c0_15 = arith.constant 0 : index
    %20 = vector.load %arg10[%c5, %c0_15] : memref<8x256xf32, #tpu.memory_space<vmem>>, vector<1x256xf32>
    tpu.vector_store %arg10[%c5, %c0_15], %19 {strides = array<i32>} : memref<8x256xf32, #tpu.memory_space<vmem>>, vector<1x256xf32>,
    %cst_16 = arith.constant 0.000000e+00 : f32
    %21 = vector.broadcast %cst_16 : f32 to vector<2x256xf32>
    %c6 = arith.constant 6 : index
    %c0_17 = arith.constant 0 : index
    %22 = vector.load %arg10[%c6, %c0_17] : memref<8x256xf32, #tpu.memory_space<vmem>>, vector<2x256xf32>
    tpu.vector_store %arg10[%c6, %c0_17], %21 {strides = array<i32>} : memref<8x256xf32, #tpu.memory_space<vmem>>, vector<2x256xf32>,
    %c0_18 = arith.constant 0 : index
    %c0_19 = arith.constant 0 : index
    %23 = vector.load %arg10[%c0_18, %c0_19] : memref<8x256xf32, #tpu.memory_space<vmem>>, vector<8x256xf32>
    %24 = arith.truncf %23 : vector<8x256xf32> to vector<8x256xbf16>
    %c0_20 = arith.constant 0 : index
    %c0_21 = arith.constant 0 : index
    %25 = vector.load %arg4[%c0_20, %c0_21] : memref<32x8xbf16, #tpu.memory_space<vmem>>, vector<32x8xbf16>
    %cst_22 = arith.constant dense<0.000000e+00> : vector<32x256xf32>
    %26 = tpu.matmul %25, %24, %cst_22 {dimension_numbers = #tpu.dot_dimension_numbers<[1], [0], [0], [1], [0, 0, 1, 1], [], []>} : vector<32x8xbf16>, vector<8x256xbf16>, vector<32x256xf32> -> vector<32x256xf32>
    %cst_23 = arith.constant 2.000000e-01 : f32
    %27 = vector.broadcast %cst_23 : f32 to vector<32x256xf32>
    %28 = arith.mulf %27, %26 : vector<32x256xf32>
    %29 = arith.maximumf %26, %28 : vector<32x256xf32>
    %c0_24 = arith.constant 0 : index
    %c0_25 = arith.constant 0 : index
    %30 = vector.load %arg5[%c0_24, %c0_25] : memref<32x32xbf16, #tpu.memory_space<vmem>>, vector<32x32xbf16>
    %31 = arith.truncf %29 : vector<32x256xf32> to vector<32x256xbf16>
    %cst_26 = arith.constant dense<0.000000e+00> : vector<32x256xf32>
    %32 = tpu.matmul %30, %31, %cst_26 {dimension_numbers = #tpu.dot_dimension_numbers<[1], [0], [0], [1], [0, 0, 1, 1], [], []>} : vector<32x32xbf16>, vector<32x256xbf16>, vector<32x256xf32> -> vector<32x256xf32>
    %c0_27 = arith.constant 0 : index
    %c0_28 = arith.constant 0 : index
    %33 = vector.load %arg6[%c0_27, %c0_28] : memref<32x1xf32, #tpu.memory_space<vmem>>, vector<32x1xf32>
    %34 = vector.broadcast %33 : vector<32x1xf32> to vector<32x256xf32>
    %35 = arith.addf %32, %34 : vector<32x256xf32>
    %cst_29 = arith.constant 2.000000e-01 : f32
    %36 = vector.broadcast %cst_29 : f32 to vector<32x256xf32>
    %37 = arith.mulf %36, %35 : vector<32x256xf32>
    %38 = arith.maximumf %35, %37 : vector<32x256xf32>
    %c0_30 = arith.constant 0 : index
    %c0_31 = arith.constant 0 : index
    %39 = vector.load %arg7[%c0_30, %c0_31] : memref<1x32xbf16, #tpu.memory_space<vmem>>, vector<1x32xbf16>
    %40 = arith.truncf %38 : vector<32x256xf32> to vector<32x256xbf16>
    %cst_32 = arith.constant dense<0.000000e+00> : vector<1x256xf32>
    %41 = tpu.matmul %39, %40, %cst_32 {dimension_numbers = #tpu.dot_dimension_numbers<[1], [0], [0], [1], [0, 0, 1, 1], [], []>} : vector<1x32xbf16>, vector<32x256xbf16>, vector<1x256xf32> -> vector<1x256xf32>
    %c0_33 = arith.constant 0 : index
    %c0_34 = arith.constant 0 : index
    %42 = vector.load %arg8[%c0_33, %c0_34] : memref<1x1xf32, #tpu.memory_space<vmem>>, vector<1x1xf32>
    %43 = vector.broadcast %42 : vector<1x1xf32> to vector<1x256xf32>
    %44 = arith.addf %41, %43 : vector<1x256xf32>
    %cst_35 = arith.constant 0.000000e+00 : f32
    %45 = vector.broadcast %cst_35 : f32 to vector<1x256xf32>
    %46 = arith.subf %45, %44 : vector<1x256xf32>
    %cst_36 = arith.constant 0.000000e+00 : f32
    %47 = vector.broadcast %cst_36 : f32 to vector<1x256xf32>
    %48 = arith.maximumf %46, %47 : vector<1x256xf32>
    %49 = math.absf %44 : vector<1x256xf32>
    %cst_37 = arith.constant 0.000000e+00 : f32
    %50 = vector.broadcast %cst_37 : f32 to vector<1x256xf32>
    %51 = arith.subf %50, %49 : vector<1x256xf32>
    %52 = math.exp %51 : vector<1x256xf32>
    %cst_38 = arith.constant 1.000000e+00 : f32
    %53 = vector.broadcast %cst_38 : f32 to vector<1x256xf32>
    %54 = arith.addf %53, %52 : vector<1x256xf32>
    %55 = math.log %54 : vector<1x256xf32>
    %56 = arith.addf %48, %55 : vector<1x256xf32>
    %57 = arith.addf %44, %56 : vector<1x256xf32>
    %cst_39 = arith.constant 1.000000e+02 : f32
    %58 = vector.broadcast %cst_39 : f32 to vector<1x256xf32>
    %59 = arith.minimumf %56, %58 : vector<1x256xf32>
    %cst_40 = arith.constant 0.000000e+00 : f32
    %60 = vector.broadcast %cst_40 : f32 to vector<1x256xf32>
    %61 = arith.subf %60, %59 : vector<1x256xf32>
    %cst_41 = arith.constant 1.000000e+02 : f32
    %62 = vector.broadcast %cst_41 : f32 to vector<1x256xf32>
    %63 = arith.minimumf %57, %62 : vector<1x256xf32>
    %cst_42 = arith.constant 0.000000e+00 : f32
    %64 = vector.broadcast %cst_42 : f32 to vector<1x256xf32>
    %65 = arith.subf %64, %63 : vector<1x256xf32>
    %66 = arith.mulf %6, %61 : vector<1x256xf32>
    %cst_43 = arith.constant 1.000000e+00 : f32
    %67 = vector.broadcast %cst_43 : f32 to vector<1x256xf32>
    %68 = arith.subf %67, %6 : vector<1x256xf32>
    %69 = arith.mulf %68, %65 : vector<1x256xf32>
    %70 = arith.addf %66, %69 : vector<1x256xf32>
    %cst_44 = arith.constant 0.000000e+00 : f32
    %71 = vector.broadcast %cst_44 : f32 to vector<1x256xf32>
    %72 = arith.subf %71, %70 : vector<1x256xf32>
    %73 = tpu.iota {dimensions = array<i32: 1>} : vector<1x128xi32>
    %c1_i32 = arith.constant 1 : i32
    %74 = arith.cmpi eq, %arg0, %c1_i32 : i32
    %75 = arith.extui %74 : i1 to i32
    %c0_i32 = arith.constant 0 : i32
    %76 = arith.cmpi ne, %75, %c0_i32 : i32
    scf.if %76 {
      %c256_i32 = arith.constant 256 : i32
      %80 = arith.muli %arg0, %c256_i32 : i32
      %81 = tpu.iota {dimensions = array<i32: 1>} : vector<1x256xi32>
      %82 = vector.broadcast %80 : i32 to vector<1x256xi32>
      %83 = arith.addi %82, %81 : vector<1x256xi32>
      %c512_i32 = arith.constant 512 : i32
      %84 = vector.broadcast %c512_i32 : i32 to vector<1x256xi32>
      %85 = arith.cmpi slt, %83, %84 : vector<1x256xi32>
      %cst_47 = arith.constant 0.000000e+00 : f32
      %86 = vector.broadcast %cst_47 : f32 to vector<1x256xf32>
      %87 = arith.select %85, %72, %86 : vector<1x256xi1>, vector<1x256xf32>
      %88 = vector.shape_cast %87 : vector<1x256xf32> to vector<1x1x256xf32>
      %cst_48 = arith.constant dense<0.000000e+00> : vector<1xf32>
      %89 = vector.multi_reduction <add>, %88, %cst_48 [1, 2] : vector<1x1x256xf32> to vector<1xf32>
      %90 = vector.shape_cast %89 : vector<1xf32> to vector<1x1x1xf32>
      %91 = vector.extract %90[0, 0, 0] : f32 from vector<1x1x1xf32>
      %c0_i32_49 = arith.constant 0 : i32
      %92 = vector.broadcast %c0_i32_49 : i32 to vector<1x128xi32>
      %93 = arith.cmpi eq, %73, %92 : vector<1x128xi32>
      %cst_50 = arith.constant 0.000000e+00 : f32
      %94 = vector.broadcast %91 : f32 to vector<1x128xf32>
      %95 = vector.broadcast %cst_50 : f32 to vector<1x128xf32>
      %96 = arith.select %93, %94, %95 : vector<1x128xi1>, vector<1x128xf32>
      %c0_51 = arith.constant 0 : index
      %c0_52 = arith.constant 0 : index
      %97 = vector.load %arg9[%c0_51, %c0_52] : memref<1x128xf32, #tpu.memory_space<vmem>>, vector<1x128xf32>
      tpu.vector_store %arg9[%c0_51, %c0_52], %96 {strides = array<i32>} : memref<1x128xf32, #tpu.memory_space<vmem>>, vector<1x128xf32>,
    } else {
    }
    %c1_i32_45 = arith.constant 1 : i32
    %77 = arith.cmpi ne, %arg0, %c1_i32_45 : i32
    %78 = arith.extui %77 : i1 to i32
    %c0_i32_46 = arith.constant 0 : i32
    %79 = arith.cmpi ne, %78, %c0_i32_46 : i32
    scf.if %79 {
      %80 = vector.shape_cast %72 : vector<1x256xf32> to vector<1x1x256xf32>
      %cst_47 = arith.constant dense<0.000000e+00> : vector<1xf32>
      %81 = vector.multi_reduction <add>, %80, %cst_47 [1, 2] : vector<1x1x256xf32> to vector<1xf32>
      %82 = vector.shape_cast %81 : vector<1xf32> to vector<1x1x1xf32>
      %83 = vector.extract %82[0, 0, 0] : f32 from vector<1x1x1xf32>
      %c0_i32_48 = arith.constant 0 : i32
      %84 = vector.broadcast %c0_i32_48 : i32 to vector<1x128xi32>
      %85 = arith.cmpi eq, %73, %84 : vector<1x128xi32>
      %cst_49 = arith.constant 0.000000e+00 : f32
      %86 = vector.broadcast %83 : f32 to vector<1x128xf32>
      %87 = vector.broadcast %cst_49 : f32 to vector<1x128xf32>
      %88 = arith.select %85, %86, %87 : vector<1x128xi1>, vector<1x128xf32>
      %c0_50 = arith.constant 0 : index
      %c0_51 = arith.constant 0 : index
      %89 = vector.load %arg9[%c0_50, %c0_51] : memref<1x128xf32, #tpu.memory_space<vmem>>, vector<1x128xf32>
      tpu.vector_store %arg9[%c0_50, %c0_51], %88 {strides = array<i32>} : memref<1x128xf32, #tpu.memory_space<vmem>>, vector<1x128xf32>,
    } else {
    }
    return
  }
  func.func @transform_0(%arg0: i32) -> (i32, i32) {
    %c0_i32 = arith.constant 0 : i32
    %c0_i32_0 = arith.constant 0 : i32
    return %c0_i32, %arg0 : i32, i32
  }
  func.func @transform_1(%arg0: i32) -> (i32, i32) {
    %c0_i32 = arith.constant 0 : i32
    %c0_i32_0 = arith.constant 0 : i32
    return %c0_i32, %arg0 : i32, i32
  }
  func.func @transform_2(%arg0: i32) -> (i32, i32) {
    %c0_i32 = arith.constant 0 : i32
    %c0_i32_0 = arith.constant 0 : i32
    return %c0_i32, %arg0 : i32, i32
  }
  func.func @transform_3(%arg0: i32) -> (i32, i32) {
    %c0_i32 = arith.constant 0 : i32
    %c0_i32_0 = arith.constant 0 : i32
    %c0_i32_1 = arith.constant 0 : i32
    return %c0_i32, %c0_i32_0 : i32, i32
  }
  func.func @transform_4(%arg0: i32) -> (i32, i32) {
    %c0_i32 = arith.constant 0 : i32
    %c0_i32_0 = arith.constant 0 : i32
    %c0_i32_1 = arith.constant 0 : i32
    return %c0_i32, %c0_i32_0 : i32, i32
  }
  func.func @transform_5(%arg0: i32) -> (i32, i32) {
    %c0_i32 = arith.constant 0 : i32
    %c0_i32_0 = arith.constant 0 : i32
    %c0_i32_1 = arith.constant 0 : i32
    return %c0_i32, %c0_i32_0 : i32, i32
  }
  func.func @transform_6(%arg0: i32) -> (i32, i32) {
    %c0_i32 = arith.constant 0 : i32
    %c0_i32_0 = arith.constant 0 : i32
    %c0_i32_1 = arith.constant 0 : i32
    return %c0_i32, %c0_i32_0 : i32, i32
  }
  func.func @transform_7(%arg0: i32) -> (i32, i32) {
    %c0_i32 = arith.constant 0 : i32
    %c0_i32_0 = arith.constant 0 : i32
    %c0_i32_1 = arith.constant 0 : i32
    return %c0_i32, %c0_i32_0 : i32, i32
  }
  func.func @transform_8(%arg0: i32) -> (i32, i32) {
    %c0_i32 = arith.constant 0 : i32
    %c0_i32_0 = arith.constant 0 : i32
    return %c0_i32, %arg0 : i32, i32
  }
}

</mosaic_0001>

<llo_original>
// kernel: bce_ranking_loss.1
$region0: #{bce_ranking_loss.1}
  #allocation0 [shape = 'u32[]', space=smem, size = 0x4, offset = 0x4, fixed_abs, tag = 'smem constant byte address 0x4 - core index']
  #allocation1 [shape = 'u32[144,128]{1,0:T(1,128)}', space=vmem, size = 0x12000, scoped, tag = 'internal scratch']
  #allocation2 [shape = 'f32[8,256]{1,0:T(8,128)}', space=vmem, size = 0x2000, scoped, tag = 'scratch operand']
  #allocation3 [shape = 'f32[1,1]{1,0:T(1,128)S(1)}', space=vmem, size = 0x200, scoped, tag = 'scoped memory for bce_ranking_loss.1']
  %s0 = inlined_call_operand.vmem [shape: f32[1,512], index: 0, kind: input, shape index: {}]
  %s1 = inlined_call_operand.vmem [shape: f32[1,512], index: 1, kind: input, shape index: {}]
  %s2 = inlined_call_operand.vmem [shape: f32[1,512], index: 2, kind: input, shape index: {}]
  %s3 = inlined_call_operand.vmem [shape: bf16[32,8], index: 3, kind: input, shape index: {}]
  %s4 = inlined_call_operand.vmem [shape: bf16[32,32], index: 4, kind: input, shape index: {}]
  %s5 = inlined_call_operand.vmem [shape: f32[32,1], index: 5, kind: input, shape index: {}]
  %s6 = inlined_call_operand.vmem [shape: bf16[1,32], index: 6, kind: input, shape index: {}]
  %s7 = inlined_call_operand.<no memory space> [shape: f32[1,1], index: 7, kind: input, shape index: {}]
  %s8 = inlined_call_operand.vmem [shape: f32[1,256], index: 8, kind: output, shape index: {}]
  %s9 = sld [smem:[#allocation0]]
  $region73: #{bce_ranking_loss.1} parent=0
    _
  %s11 = ssub.s32 1, %s9
  %s12 = scalar_select 0, %s11, %s9
  %v13 = vstv %s7
  %14 = vst [vmem:[#allocation3] sm:$0x1] %v13
  loop: start=0, step=1, limit=4
  $region2: #{bce_ranking_loss.1} parent=0 // loop_pre_header
    _
  $region3: #{bce_ranking_loss.1} parent=0 // loop_header
    %s16 = sphi 0, %s20
    %p17 = scmp.ge.s32.totalorder %s16, 4
    %s26 = sphi 0, %s28
    %s29 = sphi 0, %s26
    %s30 = sphi 0, %s29
    %s46 = sphi 0, %s30
    %s52 = sphi 0, %s54
    %s55 = sphi 0, %s52
    %s56 = sphi 0, %s55
    %s72 = sphi 0, %s56
    %s78 = sphi 0, %s80
    %s81 = sphi 0, %s78
    %s82 = sphi 0, %s81
    %s98 = sphi 0, %s82
    %s102 = sphi 0, %s102
    %s104 = sphi 0, %s102
    %s105 = sphi 0, %s104
    %s119 = sphi 0, %s105
    %s123 = sphi 0, %s123
    %s125 = sphi 0, %s123
    %s126 = sphi 0, %s125
    %s140 = sphi 0, %s126
    %s144 = sphi 0, %s144
    %s146 = sphi 0, %s144
    %s147 = sphi 0, %s146
    %s161 = sphi 0, %s147
    %s165 = sphi 0, %s165
    %s167 = sphi 0, %s165
    %s168 = sphi 0, %s167
    %s182 = sphi 0, %s168
    %s186 = sphi 0, %s186
    %s188 = sphi 0, %s186
    %s189 = sphi 0, %s188
    %s203 = sphi 0, %s189
    %s209 = sphi 0, %s211
    %s212 = sphi 0, %s209
    %s213 = sphi 0, %s212
    %s229 = sphi 0, %s213
  $region4: #{bce_ranking_loss.1} parent=0 // loop_header_branch
    %19 = sbr.rel (%p17) target = $region8
  $region5: #{bce_ranking_loss.1} parent=0 // loop_body
    %s21 = ssub.s32 %s16, 1
    %s22 = ssub.s32 %s16, 2
    %s23 = sadd.s32 %s16, 1
    %s24 = ssub.s32 %s16, %s23
    %p25 = scmp.eq.s32.totalorder %s24, 0
    %s27 = sadd.s32 %s26, 1
    %s28 = scalar_select %p25, %s26, %s27
    %p31 = pneg %p25
    %p32 = scmp.eq.s32.totalorder %s16, 1
    %p33 = por %p31, %p32
    %p34 = scmp.ne.s32.totalorder %s26, %s29
    %p35 = scmp.eq.s32.totalorder %s16, 0
    %p36 = por %p34, %p35
    %p37 = scmp.ne.s32.totalorder %s26, %s29
    %p38 = scmp.eq.s32.totalorder %s21, 1
    %p39 = por %p37, %p38
    %p40 = scmp.ne.s32.totalorder %s29, %s30
    %p41 = scmp.eq.s32.totalorder %s21, 0
    %p42 = por %p40, %p41
    %p43 = scmp.ne.s32.totalorder %s29, %s30
    %p44 = scmp.eq.s32.totalorder %s22, 1
    %p45 = por %p43, %p44
    %p47 = scmp.ne.s32.totalorder %s30, %s46
    %p48 = scmp.eq.s32.totalorder %s22, 0
    %p49 = por %p47, %p48
    %s50 = ssub.s32 %s16, %s23
    %p51 = scmp.eq.s32.totalorder %s50, 0
    %s53 = sadd.s32 %s52, 1
    %s54 = scalar_select %p51, %s52, %s53
    %p57 = pneg %p51
    %p58 = scmp.eq.s32.totalorder %s16, 1
    %p59 = por %p57, %p58
    %p60 = scmp.ne.s32.totalorder %s52, %s55
    %p61 = scmp.eq.s32.totalorder %s16, 0
    %p62 = por %p60, %p61
    %p63 = scmp.ne.s32.totalorder %s52, %s55
    %p64 = scmp.eq.s32.totalorder %s21, 1
    %p65 = por %p63, %p64
    %p66 = scmp.ne.s32.totalorder %s55, %s56
    %p67 = scmp.eq.s32.totalorder %s21, 0
    %p68 = por %p66, %p67
    %p69 = scmp.ne.s32.totalorder %s55, %s56
    %p70 = scmp.eq.s32.totalorder %s22, 1
    %p71 = por %p69, %p70
    %p73 = scmp.ne.s32.totalorder %s56, %s72
    %p74 = scmp.eq.s32.totalorder %s22, 0
    %p75 = por %p73, %p74
    %s76 = ssub.s32 %s16, %s23
    %p77 = scmp.eq.s32.totalorder %s76, 0
    %s79 = sadd.s32 %s78, 1
    %s80 = scalar_select %p77, %s78, %s79
    %p83 = pneg %p77
    %p84 = scmp.eq.s32.totalorder %s16, 1
    %p85 = por %p83, %p84
    %p86 = scmp.ne.s32.totalorder %s78, %s81
    %p87 = scmp.eq.s32.totalorder %s16, 0
    %p88 = por %p86, %p87
    %p89 = scmp.ne.s32.totalorder %s78, %s81
    %p90 = scmp.eq.s32.totalorder %s21, 1
    %p91 = por %p89, %p90
    %p92 = scmp.ne.s32.totalorder %s81, %s82
    %p93 = scmp.eq.s32.totalorder %s21, 0
    %p94 = por %p92, %p93
    %p95 = scmp.ne.s32.totalorder %s81, %s82
    %p96 = scmp.eq.s32.totalorder %s22, 1
    %p97 = por %p95, %p96
    %p99 = scmp.ne.s32.totalorder %s82, %s98
    %p100 = scmp.eq.s32.totalorder %s22, 0
    %p101 = por %p99, %p100
    %s103 = sadd.s32 %s102, 1
    %p106 = scmp.eq.s32.totalorder %s16, 1
    %p107 = scmp.ne.s32.totalorder %s102, %s104
    %p108 = scmp.eq.s32.totalorder %s16, 0
    %p109 = por %p107, %p108
    %p110 = scmp.ne.s32.totalorder %s102, %s104
    %p111 = scmp.eq.s32.totalorder %s21, 1
    %p112 = por %p110, %p111
    %p113 = scmp.ne.s32.totalorder %s104, %s105
    %p114 = scmp.eq.s32.totalorder %s21, 0
    %p115 = por %p113, %p114
    %p116 = scmp.ne.s32.totalorder %s104, %s105
    %p117 = scmp.eq.s32.totalorder %s22, 1
    %p118 = por %p116, %p117
    %p120 = scmp.ne.s32.totalorder %s105, %s119
    %p121 = scmp.eq.s32.totalorder %s22, 0
    %p122 = por %p120, %p121
    %s124 = sadd.s32 %s123, 1
    %p127 = scmp.eq.s32.totalorder %s16, 1
    %p128 = scmp.ne.s32.totalorder %s123, %s125
    %p129 = scmp.eq.s32.totalorder %s16, 0
    %p130 = por %p128, %p129
    %p131 = scmp.ne.s32.totalorder %s123, %s125
    %p132 = scmp.eq.s32.totalorder %s21, 1
    %p133 = por %p131, %p132
    %p134 = scmp.ne.s32.totalorder %s125, %s126
    %p135 = scmp.eq.s32.totalorder %s21, 0
    %p136 = por %p134, %p135
    %p137 = scmp.ne.s32.totalorder %s125, %s126
    %p138 = scmp.eq.s32.totalorder %s22, 1
    %p139 = por %p137, %p138
    %p141 = scmp.ne.s32.totalorder %s126, %s140
    %p142 = scmp.eq.s32.totalorder %s22, 0
    %p143 = por %p141, %p142
    %s145 = sadd.s32 %s144, 1
    %p148 = scmp.eq.s32.totalorder %s16, 1
    %p149 = scmp.ne.s32.totalorder %s144, %s146
    %p150 = scmp.eq.s32.totalorder %s16, 0
    %p151 = por %p149, %p150
    %p152 = scmp.ne.s32.totalorder %s144, %s146
    %p153 = scmp.eq.s32.totalorder %s21, 1
    %p154 = por %p152, %p153
    %p155 = scmp.ne.s32.totalorder %s146, %s147
    %p156 = scmp.eq.s32.totalorder %s21, 0
    %p157 = por %p155, %p156
    %p158 = scmp.ne.s32.totalorder %s146, %s147
    %p159 = scmp.eq.s32.totalorder %s22, 1
    %p160 = por %p158, %p159
    %p162 = scmp.ne.s32.totalorder %s147, %s161
    %p163 = scmp.eq.s32.totalorder %s22, 0
    %p164 = por %p162, %p163
    %s166 = sadd.s32 %s165, 1
    %p169 = scmp.eq.s32.totalorder %s16, 1
    %p170 = scmp.ne.s32.totalorder %s165, %s167
    %p171 = scmp.eq.s32.totalorder %s16, 0
    %p172 = por %p170, %p171
    %p173 = scmp.ne.s32.totalorder %s165, %s167
    %p174 = scmp.eq.s32.totalorder %s21, 1
    %p175 = por %p173, %p174
    %p176 = scmp.ne.s32.totalorder %s167, %s168
    %p177 = scmp.eq.s32.totalorder %s21, 0
    %p178 = por %p176, %p177
    %p179 = scmp.ne.s32.totalorder %s167, %s168
    %p180 = scmp.eq.s32.totalorder %s22, 1
    %p181 = por %p179, %p180
    %p183 = scmp.ne.s32.totalorder %s168, %s182
    %p184 = scmp.eq.s32.totalorder %s22, 0
    %p185 = por %p183, %p184
    %s187 = sadd.s32 %s186, 1
    %p190 = scmp.eq.s32.totalorder %s16, 1
    %p191 = scmp.ne.s32.totalorder %s186, %s188
    %p192 = scmp.eq.s32.totalorder %s16, 0
    %p193 = por %p191, %p192
    %p194 = scmp.ne.s32.totalorder %s186, %s188
    %p195 = scmp.eq.s32.totalorder %s21, 1
    %p196 = por %p194, %p195
    %p197 = scmp.ne.s32.totalorder %s188, %s189
    %p198 = scmp.eq.s32.totalorder %s21, 0
    %p199 = por %p197, %p198
    %p200 = scmp.ne.s32.totalorder %s188, %s189
    %p201 = scmp.eq.s32.totalorder %s22, 1
    %p202 = por %p200, %p201
    %p204 = scmp.ne.s32.totalorder %s189, %s203
    %p205 = scmp.eq.s32.totalorder %s22, 0
    %p206 = por %p204, %p205
    %s207 = ssub.s32 %s16, %s23
    %p208 = scmp.eq.s32.totalorder %s207, 0
    %s210 = sadd.s32 %s209, 1
    %s211 = scalar_select %p208, %s209, %s210
    %p214 = pneg %p208
    %p215 = scmp.eq.s32.totalorder %s16, 1
    %p216 = por %p214, %p215
    %p217 = scmp.ne.s32.totalorder %s209, %s212
    %p218 = scmp.eq.s32.totalorder %s16, 0
    %p219 = por %p217, %p218
    %p220 = scmp.ne.s32.totalorder %s209, %s212
    %p221 = scmp.eq.s32.totalorder %s21, 1
    %p222 = por %p220, %p221
    %p223 = scmp.ne.s32.totalorder %s212, %s213
    %p224 = scmp.eq.s32.totalorder %s21, 0
    %p225 = por %p223, %p224
    %p226 = scmp.ne.s32.totalorder %s212, %s213
    %p227 = scmp.eq.s32.totalorder %s22, 1
    %p228 = por %p226, %p227
    %p230 = scmp.ne.s32.totalorder %s213, %s229
    %p231 = scmp.eq.s32.totalorder %s22, 0
    %p232 = por %p230, %p231
    %p233 = scmp.le.s32.totalorder 1, %s16
    %p234 = scmp.lt.s32.totalorder %s16, 3
    %p235 = pnand %p233, %p234
    %p236 = pneg %p235
    // Predicated region
    $region9: #{bce_ranking_loss.1} parent=5 // pred_check
      _
    $region10: #{bce_ranking_loss.1} parent=5 // pred_check_branch
      %238 = sbr.rel (%p235) target = $region12
    $region11: #{bce_ranking_loss.1} parent=5 // pred_region
      %s239 = ssub.s32 %s16, 1
      // Predicated region
      $region13: #{bce_ranking_loss.1} parent=11 // pred_check
        %p240 = pneg %p115
      $region14: #{bce_ranking_loss.1} parent=11 // pred_check_branch
        %242 = sbr.rel (%p240) target = $region16
      $region15: #{bce_ranking_loss.1} parent=11 // pred_region
        _
      $region16: #{bce_ranking_loss.1} parent=11 // pred_fallthru
        _
      // Predicated region
      $region17: #{bce_ranking_loss.1} parent=11 // pred_check
        %p243 = pneg %p136
      $region18: #{bce_ranking_loss.1} parent=11 // pred_check_branch
        %245 = sbr.rel (%p243) target = $region20
      $region19: #{bce_ranking_loss.1} parent=11 // pred_region
        _
      $region20: #{bce_ranking_loss.1} parent=11 // pred_fallthru
        _
      // Predicated region
      $region21: #{bce_ranking_loss.1} parent=11 // pred_check
        %p246 = pneg %p157
      $region22: #{bce_ranking_loss.1} parent=11 // pred_check_branch
        %248 = sbr.rel (%p246) target = $region24
      $region23: #{bce_ranking_loss.1} parent=11 // pred_region
        _
      $region24: #{bce_ranking_loss.1} parent=11 // pred_fallthru
        _
      // Predicated region
      $region25: #{bce_ranking_loss.1} parent=11 // pred_check
        %p249 = pneg %p178
      $region26: #{bce_ranking_loss.1} parent=11 // pred_check_branch
        %251 = sbr.rel (%p249) target = $region28
      $region27: #{bce_ranking_loss.1} parent=11 // pred_region
        _
      $region28: #{bce_ranking_loss.1} parent=11 // pred_fallthru
        _
      // Predicated region
      $region29: #{bce_ranking_loss.1} parent=11 // pred_check
        %p252 = pneg %p199
      $region30: #{bce_ranking_loss.1} parent=11 // pred_check_branch
        %254 = sbr.rel (%p252) target = $region32
      $region31: #{bce_ranking_loss.1} parent=11 // pred_region
        _
      $region32: #{bce_ranking_loss.1} parent=11 // pred_fallthru
        _
    $region12: #{bce_ranking_loss.1} parent=5 // pred_fallthru
      _
    %p255 = scmp.lt.s32.totalorder %s16, 2
    // Predicated region
    $region33: #{bce_ranking_loss.1} parent=5 // pred_check
      %p256 = pneg %p255
    $region34: #{bce_ranking_loss.1} parent=5 // pred_check_branch
      %258 = sbr.rel (%p256) target = $region36
    $region35: #{bce_ranking_loss.1} parent=5 // pred_region
      // Predicated region
      $region37: #{bce_ranking_loss.1} parent=35 // pred_check
        %p259 = pneg %p36
      $region38: #{bce_ranking_loss.1} parent=35 // pred_check_branch
        %261 = sbr.rel (%p259) target = $region40
      $region39: #{bce_ranking_loss.1} parent=35 // pred_region
        %s262 = smul.u32 2, %s16
        %p263 = scmp.lt.s32.totalorder %s262, 3
        %s264 = scalar_select %p263, %s262, 3
        %s265 = scalar_lea.vmem %s0, %s264
        %s266 = smul.u32 2, %s16
      $region40: #{bce_ranking_loss.1} parent=35 // pred_fallthru
        _
      // Predicated region
      $region41: #{bce_ranking_loss.1} parent=35 // pred_check
        %p267 = pneg %p62
      $region42: #{bce_ranking_loss.1} parent=35 // pred_check_branch
        %269 = sbr.rel (%p267) target = $region44
      $region43: #{bce_ranking_loss.1} parent=35 // pred_region
        %s270 = smul.u32 2, %s16
        %p271 = scmp.lt.s32.totalorder %s270, 3
        %s272 = scalar_select %p271, %s270, 3
        %s273 = scalar_lea.vmem %s1, %s272
        %s274 = smul.u32 2, %s16
      $region44: #{bce_ranking_loss.1} parent=35 // pred_fallthru
        _
      // Predicated region
      $region45: #{bce_ranking_loss.1} parent=35 // pred_check
        %p275 = pneg %p88
      $region46: #{bce_ranking_loss.1} parent=35 // pred_check_branch
        %277 = sbr.rel (%p275) target = $region48
      $region47: #{bce_ranking_loss.1} parent=35 // pred_region
        %s278 = smul.u32 2, %s16
        %p279 = scmp.lt.s32.totalorder %s278, 3
        %s280 = scalar_select %p279, %s278, 3
        %s281 = scalar_lea.vmem %s2, %s280
        %s282 = smul.u32 2, %s16
      $region48: #{bce_ranking_loss.1} parent=35 // pred_fallthru
        _
    $region36: #{bce_ranking_loss.1} parent=5 // pred_fallthru
      _
    %p283 = scmp.le.s32.totalorder 1, %s16
    %p284 = scmp.lt.s32.totalorder %s16, 3
    %p285 = pnand %p283, %p284
    %p286 = pneg %p285
    // Predicated region
    $region49: #{bce_ranking_loss.1} parent=5 // pred_check
      _
    $region50: #{bce_ranking_loss.1} parent=5 // pred_check_branch
      %288 = sbr.rel (%p285) target = $region52
    $region51: #{bce_ranking_loss.1} parent=5 // pred_region
      %s289 = ssub.s32 %s16, 1
      %s290 = smul.u32 2, %s21
      %p291 = scmp.lt.s32.totalorder %s290, 3
      %s292 = scalar_select %p291, %s290, 3
      %s293 = scalar_lea.vmem %s0, %s292
      %p294 = pneg %p42
      %p295 = pneg %p39
      %s296 = smul.u32 2, %s21
      %p297 = scmp.lt.s32.totalorder %s296, 3
      %s298 = scalar_select %p297, %s296, 3
      %s299 = scalar_lea.vmem %s1, %s298
      %p300 = pneg %p68
      %p301 = pneg %p65
      %s302 = smul.u32 2, %s21
      %p303 = scmp.lt.s32.totalorder %s302, 3
      %s304 = scalar_select %p303, %s302, 3
      %s305 = scalar_lea.vmem %s2, %s304
      %p306 = pneg %p94
      %p307 = pneg %p91
      %p308 = pneg %p115
      %p309 = pneg %p112
      %p310 = pneg %p136
      %p311 = pneg %p133
      %p312 = pneg %p157
      %p313 = pneg %p154
      %p314 = pneg %p178
      %p315 = pneg %p175
      %p316 = pneg %p199
      %p317 = pneg %p196
      %p318 = pneg %p225
      %p319 = pneg %p222
      %p320 = scmp.lt.s32.totalorder %s21, 1
      %s321 = scalar_select %p320, %s21, 1
      %s322 = scalar_lea.vmem %s8, %s321
      %s323 = smul.u32 2, %s21
      %p324 = scmp.lt.s32.totalorder %s323, 3
      %s325 = scalar_select %p324, %s323, 3
      %s326 = scalar_lea.vmem %s0, %s325
      %s327 = smul.u32 2, %s21
      %s328 = smul.u32 2, %s21
      %p329 = scmp.lt.s32.totalorder %s328, 3
      %s330 = scalar_select %p329, %s328, 3
      %s331 = scalar_lea.vmem %s1, %s330
      %s332 = smul.u32 2, %s21
      %s333 = smul.u32 2, %s21
      %p334 = scmp.lt.s32.totalorder %s333, 3
      %s335 = scalar_select %p334, %s333, 3
      %s336 = scalar_lea.vmem %s2, %s335
      %s337 = smul.u32 2, %s21
      %p338 = scmp.lt.s32.totalorder %s21, 1
      %s339 = scalar_select %p338, %s21, 1
      %s340 = scalar_lea.vmem %s8, %s339
      %v342 = vld [vmem:[%s326] sm:$0x3]
      %v343 = vld [vmem:[%s331] sm:$0x3]
      %v344 = vld [vmem:[%s336] sm:$0x3]
      %v345 = vadd.f32 %v344, 1.0
      %v346 = vmul.f32 %v345, 0.5
      %v347 = vlaneseq
      %vm348 = vcmp.ge.s32.totalorder %v347, 0
      %vm349 = vcmp.lt.s32.totalorder %v347, 256
      %vm350 = vmand %vm348, %vm349
      %351 = vst.msk [vmem:[#allocation2] ss:$8 sm:$0x3] %vm350, %v342
      %352 = vst.msk [vmem:[#allocation2] ss:$8 sm:$0x0] %vm350, %v342
      %s353 = scalar_lea.vmem [#allocation2], 1
      %354 = vst.msk [vmem:[%s353] ss:$8 sm:$0x3] %vm350, %v343
      %355 = vst.msk [vmem:[%s353] ss:$8 sm:$0x0] %vm350, %v343
      %v356 = vsub.f32 %v342, %v343
      %s357 = scalar_lea.vmem [#allocation2], 2
      %358 = vst.msk [vmem:[%s357] ss:$8 sm:$0x3] %vm350, %v356
      %359 = vst.msk [vmem:[%s357] ss:$8 sm:$0x0] %vm350, %v356
      %v360 = vadd.f32 %v343, 0.1
      %v361 = vrcp.pop %v360
      %v362 = vmul.f32 %v342, %v361
      %s363 = scalar_lea.vmem [#allocation2], 3
      %364 = vst.msk [vmem:[%s363] ss:$8 sm:$0x3] %vm350, %v362
      %365 = vst.msk [vmem:[%s363] ss:$8 sm:$0x0] %vm350, %v362
      %v366 = vadd.f32 %v342, 0.1
      %v367 = vrcp.pop %v366
      %v368 = vmul.f32 %v343, %v367
      %s369 = scalar_lea.vmem [#allocation2], 4
      %370 = vst.msk [vmem:[%s369] ss:$8 sm:$0x3] %vm350, %v368
      %371 = vst.msk [vmem:[%s369] ss:$8 sm:$0x0] %vm350, %v368
      %s372 = scalar_lea.vmem [#allocation2], 5
      %373 = vst.msk [vmem:[%s372] ss:$8 sm:$0x3] %vm350, 1.0
      %374 = vst.msk [vmem:[%s372] ss:$8 sm:$0x0] %vm350, 1.0
      %375 = vst [vmem:[#allocation2] sm:$0xc0] 0.0
      %376 = vst [vmem:[#allocation2 + $0x8] sm:$0xc0] 0.0
      %v377 = vld [vmem:[#allocation2] sm:$0xff]
      %v378 = vld [vmem:[#allocation2 + $0x8] sm:$0xff]
      %v379 = vpack.c.bf16 %v377, %v377
      %v380 = vpack.c.bf16 %v378, %v378
      %v381 = vld [vmem:[%s3] sm:$0xf]
      %v382 = vld [vmem:[%s3 + $0x4] sm:$0xf]
      %v383 = vld [vmem:[%s3 + $0x8] sm:$0xf]
      %v384 = vld [vmem:[%s3 + $0xc] sm:$0xf]
      %v389 = vunpack.c.l.b16 %v381
      %v390 = vunpack.c.l.b16 %v382
      %v391 = vunpack.c.l.b16 %v383
      %v392 = vunpack.c.l.b16 %v384
      %v393 = vpack.c.b16 %v390, %v389
      %v394 = vpack.c.b16 %v392, %v391
      %vm395 = vcmask 64512
      %v397 = vsel %vm395, %v393, 0
      %v400 = vsel %vm395, %v394, 0
      %vm402 = vcmask 1043456
      %v404 = vsel %vm402, %v379, 0
      %v407 = vsel %vm402, %v380, 0
      %409 = vmatprep.subr.bf16.mxu0 %v407
      %410 = vmatpush1.bf16.msra.mxu0 %v404
      %411 = vmatprep.subr.bf16.mxu0 0
      %412 = vmatpush1.bf16.msra.mxu0 0
      %413 = vmatprep.subr.bf16.mxu0 0
      %414 = vmatpush1.bf16.msra.mxu0 0
      %415 = vmatprep.subr.bf16.mxu0 0
      %416 = vmatpush1.bf16.msra.mxu0 0
      %417 = vmatprep.subr.bf16.mxu0 0
      %418 = vmatpush1.bf16.msra.mxu0 0
      %419 = vmatprep.subr.bf16.mxu0 0
      %420 = vmatpush1.bf16.msra.mxu0 0
      %421 = vmatprep.subr.bf16.mxu0 0
      %422 = vmatpush1.bf16.msra.mxu0 0
      %423 = vmatprep.subr.bf16.mxu0 0
      %424 = vmatpush1.bf16.msra.mxu0 0
      %425 = vmatprep.subr.bf16.mxu0 0
      %426 = vmatpush1.bf16.msra.mxu0 0
      %427 = vmatprep.subr.bf16.mxu0 0
      %428 = vmatpush1.bf16.msra.mxu0 0
      %429 = vmatprep.subr.bf16.mxu0 0
      %430 = vmatpush1.bf16.msra.mxu0 0
      %431 = vmatprep.subr.bf16.mxu0 0
      %432 = vmatpush1.bf16.msra.mxu0 0
      %433 = vmatprep.subr.bf16.mxu0 0
      %434 = vmatpush1.bf16.msra.mxu0 0
      %435 = vmatprep.subr.bf16.mxu0 0
      %436 = vmatpush1.bf16.msra.mxu0 0
      %437 = vmatprep.subr.bf16.mxu0 0
      %438 = vmatpush1.bf16.msra.mxu0 0
      %439 = vmatprep.subr.bf16.mxu0 0
      %440 = vmatpush1.bf16.msra.mxu0 0
      %441 = vmatprep.mubr.bf16.mxu0 0
      %442 = vmatmul.mubr.bf16.gmra.mrb[0].mxu0 %v397
      %v443 = vpop.f32.mrb[0].mxu0
      %v444 = vadd.f32 0.0, %v443
      %v445 = vpop.f32.mrb[0].mxu0
      %v446 = vadd.f32 0.0, %v445
      %v447 = vpop.f32.mrb[0].mxu0
      %v448 = vadd.f32 0.0, %v447
      %v449 = vpop.f32.mrb[0].mxu0
      %v450 = vadd.f32 0.0, %v449
      %451 = vmatprep.mubr.bf16.mxu0 0
      %452 = vmatmul.mubr.bf16.gmra.mrb[0].mxu0 %v400
      %v453 = vpop.f32.mrb[0].mxu0
      %v454 = vadd.f32 0.0, %v453
      %v455 = vpop.f32.mrb[0].mxu0
      %v456 = vadd.f32 0.0, %v455
      %v457 = vpop.f32.mrb[0].mxu0
      %v458 = vadd.f32 0.0, %v457
      %v459 = vpop.f32.mrb[0].mxu0
      %v460 = vadd.f32 0.0, %v459
      %461 = vdwg.mxu0
      %v462 = vmul.f32 %v444, 0.2
      %v463 = vmul.f32 %v446, 0.2
      %v464 = vmul.f32 %v448, 0.2
      %v465 = vmul.f32 %v450, 0.2
      %v466 = vmul.f32 %v454, 0.2
      %v467 = vmul.f32 %v456, 0.2
      %v468 = vmul.f32 %v458, 0.2
      %v469 = vmul.f32 %v460, 0.2
      %v470 = vmax.f32 %v444, %v462
      %v471 = vmax.f32 %v446, %v463
      %v472 = vmax.f32 %v448, %v464
      %v473 = vmax.f32 %v450, %v465
      %v474 = vmax.f32 %v454, %v466
      %v475 = vmax.f32 %v456, %v467
      %v476 = vmax.f32 %v458, %v468
      %v477 = vmax.f32 %v460, %v469
      %v478 = vld [vmem:[%s4] sm:$0xf]
      %v479 = vld [vmem:[%s4 + $0x4] sm:$0xf]
      %v480 = vld [vmem:[%s4 + $0x8] sm:$0xf]
      %v481 = vld [vmem:[%s4 + $0xc] sm:$0xf]
      %v482 = vpack.c.bf16 %v472, %v470
      %v483 = vpack.c.bf16 %v473, %v471
      %v484 = vpack.c.bf16 %v476, %v474
      %v485 = vpack.c.bf16 %v477, %v475
      %v486 = vld [vmem:[%s5] sm:$0xff]
      %v487 = vld [vmem:[%s5 + $0x8] sm:$0xff]
      %v488 = vld [vmem:[%s5 + $0x10] sm:$0xff]
      %v489 = vld [vmem:[%s5 + $0x18] sm:$0xff]
      %491 = vset.pattern.permute.xlu0 0
      %492 = vperm.xlu0 %491, %v486
      %v493 = vpop.permute.xlu0 %492
      %496 = vset.pattern.permute.xlu0 0
      %497 = vperm.xlu0 %496, %v487
      %v498 = vpop.permute.xlu0 %497
      %501 = vset.pattern.permute.xlu0 0
      %502 = vperm.xlu0 %501, %v488
      %v503 = vpop.permute.xlu0 %502
      %506 = vset.pattern.permute.xlu0 0
      %507 = vperm.xlu0 %506, %v489
      %v508 = vpop.permute.xlu0 %507
      %v514 = vunpack.c.l.b16 %v478
      %v515 = vunpack.c.l.b16 %v479
      %v516 = vunpack.c.l.b16 %v480
      %v517 = vunpack.c.l.b16 %v481
      %v518 = vpack.c.b16 %v515, %v514
      %v519 = vpack.c.b16 %v517, %v516
      %vm520 = vcmask 261120
      %v522 = vsel %vm520, %v518, 0
      %v525 = vsel %vm520, %v519, 0
      %527 = vmatprep.subr.bf16.mxu0 %v483
      %528 = vmatpush1.bf16.msra.mxu0 %v482
      %529 = vmatprep.subr.bf16.mxu0 %v485
      %530 = vmatpush1.bf16.msra.mxu0 %v484
      %531 = vmatprep.subr.bf16.mxu0 0
      %532 = vmatpush1.bf16.msra.mxu0 0
      %533 = vmatprep.subr.bf16.mxu0 0
      %534 = vmatpush1.bf16.msra.mxu0 0
      %535 = vmatprep.subr.bf16.mxu0 0
      %536 = vmatpush1.bf16.msra.mxu0 0
      %537 = vmatprep.subr.bf16.mxu0 0
      %538 = vmatpush1.bf16.msra.mxu0 0
      %539 = vmatprep.subr.bf16.mxu0 0
      %540 = vmatpush1.bf16.msra.mxu0 0
      %541 = vmatprep.subr.bf16.mxu0 0
      %542 = vmatpush1.bf16.msra.mxu0 0
      %543 = vmatprep.subr.bf16.mxu0 0
      %544 = vmatpush1.bf16.msra.mxu0 0
      %545 = vmatprep.subr.bf16.mxu0 0
      %546 = vmatpush1.bf16.msra.mxu0 0
      %547 = vmatprep.subr.bf16.mxu0 0
      %548 = vmatpush1.bf16.msra.mxu0 0
      %549 = vmatprep.subr.bf16.mxu0 0
      %550 = vmatpush1.bf16.msra.mxu0 0
      %551 = vmatprep.subr.bf16.mxu0 0
      %552 = vmatpush1.bf16.msra.mxu0 0
      %553 = vmatprep.subr.bf16.mxu0 0
      %554 = vmatpush1.bf16.msra.mxu0 0
      %555 = vmatprep.subr.bf16.mxu0 0
      %556 = vmatpush1.bf16.msra.mxu0 0
      %557 = vmatprep.subr.bf16.mxu0 0
      %558 = vmatpush1.bf16.msra.mxu0 0
      %559 = vmatprep.mubr.bf16.mxu0 0
      %560 = vmatmul.mubr.bf16.gmra.mrb[0].mxu0 %v522
      %v561 = vpop.f32.mrb[0].mxu0
      %v562 = vadd.f32 %v493, %v561
      %v563 = vpop.f32.mrb[0].mxu0
      %v564 = vadd.f32 %v493, %v563
      %v565 = vpop.f32.mrb[0].mxu0
      %v566 = vadd.f32 %v498, %v565
      %v567 = vpop.f32.mrb[0].mxu0
      %v568 = vadd.f32 %v498, %v567
      %569 = vmatprep.mubr.bf16.mxu0 0
      %570 = vmatmul.mubr.bf16.gmra.mrb[0].mxu0 %v525
      %v571 = vpop.f32.mrb[0].mxu0
      %v572 = vadd.f32 %v503, %v571
      %v573 = vpop.f32.mrb[0].mxu0
      %v574 = vadd.f32 %v503, %v573
      %v575 = vpop.f32.mrb[0].mxu0
      %v576 = vadd.f32 %v508, %v575
      %v577 = vpop.f32.mrb[0].mxu0
      %v578 = vadd.f32 %v508, %v577
      %579 = vdwg.mxu0
      %v580 = vmul.f32 %v562, 0.2
      %v581 = vmul.f32 %v564, 0.2
      %v582 = vmul.f32 %v566, 0.2
      %v583 = vmul.f32 %v568, 0.2
      %v584 = vmul.f32 %v572, 0.2
      %v585 = vmul.f32 %v574, 0.2
      %v586 = vmul.f32 %v576, 0.2
      %v587 = vmul.f32 %v578, 0.2
      %v588 = vmax.f32 %v562, %v580
      %v589 = vmax.f32 %v564, %v581
      %v590 = vmax.f32 %v566, %v582
      %v591 = vmax.f32 %v568, %v583
      %v592 = vmax.f32 %v572, %v584
      %v593 = vmax.f32 %v574, %v585
      %v594 = vmax.f32 %v576, %v586
      %v595 = vmax.f32 %v578, %v587
      %v596 = vld [vmem:[%s6] sm:$0x1]
      %v597 = vpack.c.bf16 %v590, %v588
      %v598 = vpack.c.bf16 %v591, %v589
      %v599 = vpack.c.bf16 %v594, %v592
      %v600 = vpack.c.bf16 %v595, %v593
      %v601 = vld [vmem:[#allocation3] sm:$0x1]
      %603 = vset.pattern.permute.xlu0 0
      %604 = vperm.xlu0 %603, %v601
      %v605 = vpop.permute.xlu0 %604
      %v607 = vlaneseq
      %v608 = vshrl.u32 %v607, 7
      %v609 = vsub.s32 0, %v608
      %v610 = vrot.slane %v605, %v609
      %v612 = vsel %vm520, %v596, 0
      %614 = vmatprep.subr.bf16.mxu0 %v598
      %615 = vmatpush1.bf16.msra.mxu0 %v597
      %616 = vmatprep.subr.bf16.mxu0 %v600
      %617 = vmatpush1.bf16.msra.mxu0 %v599
      %618 = vmatprep.subr.bf16.mxu0 0
      %619 = vmatpush1.bf16.msra.mxu0 0
      %620 = vmatprep.subr.bf16.mxu0 0
      %621 = vmatpush1.bf16.msra.mxu0 0
      %622 = vmatprep.subr.bf16.mxu0 0
      %623 = vmatpush1.bf16.msra.mxu0 0
      %624 = vmatprep.subr.bf16.mxu0 0
      %625 = vmatpush1.bf16.msra.mxu0 0
      %626 = vmatprep.subr.bf16.mxu0 0
      %627 = vmatpush1.bf16.msra.mxu0 0
      %628 = vmatprep.subr.bf16.mxu0 0
      %629 = vmatpush1.bf16.msra.mxu0 0
      %630 = vmatprep.subr.bf16.mxu0 0
      %631 = vmatpush1.bf16.msra.mxu0 0
      %632 = vmatprep.subr.bf16.mxu0 0
      %633 = vmatpush1.bf16.msra.mxu0 0
      %634 = vmatprep.subr.bf16.mxu0 0
      %635 = vmatpush1.bf16.msra.mxu0 0
      %636 = vmatprep.subr.bf16.mxu0 0
      %637 = vmatpush1.bf16.msra.mxu0 0
      %638 = vmatprep.subr.bf16.mxu0 0
      %639 = vmatpush1.bf16.msra.mxu0 0
      %640 = vmatprep.subr.bf16.mxu0 0
      %641 = vmatpush1.bf16.msra.mxu0 0
      %642 = vmatprep.subr.bf16.mxu0 0
      %643 = vmatpush1.bf16.msra.mxu0 0
      %644 = vmatprep.subr.bf16.mxu0 0
      %645 = vmatpush1.bf16.msra.mxu0 0
      %646 = vmatprep.mubr.bf16.mxu0 0
      %647 = vmatmul.mubr.bf16.gmra.mrb[0].mxu0 %v612
      %v648 = vpop.f32.mrb[0].mxu0
      %v649 = vadd.f32 %v610, %v648
      %v650 = vpop.f32.mrb[0].mxu0
      %v651 = vadd.f32 %v610, %v650
      %v652 = vpop.f32.mrb[0].mxu0
      %v653 = vpop.f32.mrb[0].mxu0
      %654 = vdwg.mxu0
      %v655 = vsub.f32 0.0, %v649
      %v656 = vsub.f32 0.0, %v651
      %v657 = vmax.f32 %v655, 0.0
      %v658 = vmax.f32 %v656, 0.0
      %v659 = vand.u32 2147483647, %v649
      %v660 = vand.u32 2147483647, %v651
      %v661 = vsub.f32 0.0, %v659
      %v662 = vsub.f32 0.0, %v660
      %v663 = vmul.f32 %v661, 1.442695
      %v664 = vpow.pop %v663
      %v665 = vmul.f32 %v662, 1.442695
      %v666 = vpow.pop %v665
      %v667 = vadd.f32 %v664, 1.0
      %v668 = vadd.f32 %v666, 1.0
      %v669 = vlog2.pop %v667
      %v670 = vmul.f32 %v669, 0.6931472
      %v671 = vlog2.pop %v668
      %v672 = vmul.f32 %v671, 0.6931472
      %v673 = vadd.f32 %v657, %v670
      %v674 = vadd.f32 %v658, %v672
      %v675 = vadd.f32 %v649, %v673
      %v676 = vadd.f32 %v651, %v674
      %v677 = vmin.f32 %v673, 100.0
      %v678 = vmin.f32 %v674, 100.0
      %v679 = vsub.f32 0.0, %v677
      %v680 = vsub.f32 0.0, %v678
      %v681 = vmin.f32 %v675, 100.0
      %v682 = vmin.f32 %v676, 100.0
      %v683 = vsub.f32 0.0, %v681
      %v684 = vsub.f32 0.0, %v682
      %v687 = vcombine.low %v679, %v680
      %v689 = vunpack.c.l.s4 1966171168
      %v690 = vunpack.c.0.s8 %v689
      %v691 = vlaneseq
      %v692 = vshrl.u32 %v691, 7
      %v693 = vsub.s32 %v690, %v692
      %v694 = vrot.slane %v687, %v693
      %v696 = vunpack.c.l.s4 1966171168
      %v697 = vunpack.c.0.s8 %v696
      %v698 = vlaneseq
      %v699 = vshrl.u32 %v698, 7
      %v700 = vsub.s32 %v697, %v699
      %v701 = vrot.slane %v694, %v700
      %v703 = vmul.f32 %v346, %v701
      %v704 = vsub.f32 1.0, %v346
      %v707 = vcombine.low %v683, %v684
      %v709 = vunpack.c.l.s4 1966171168
      %v710 = vunpack.c.0.s8 %v709
      %v711 = vlaneseq
      %v712 = vshrl.u32 %v711, 7
      %v713 = vsub.s32 %v710, %v712
      %v714 = vrot.slane %v707, %v713
      %v716 = vunpack.c.l.s4 1966171168
      %v717 = vunpack.c.0.s8 %v716
      %v718 = vlaneseq
      %v719 = vshrl.u32 %v718, 7
      %v720 = vsub.s32 %v717, %v719
      %v721 = vrot.slane %v714, %v720
      %v723 = vmul.f32 %v704, %v721
      %v724 = vadd.f32 %v703, %v723
      %v725 = vsub.f32 0.0, %v724
      %v726 = vlaneseq
      %v727 = vand.u32 %v726, 127
      %p728 = scmp.eq.s32.totalorder %s21, 1
      // Predicated region
      $region53: #{bce_ranking_loss.1} parent=51 // pred_check
        %p729 = pneg %p728
      $region54: #{bce_ranking_loss.1} parent=51 // pred_check_branch
        %731 = sbr.rel (%p729) target = $region56
      $region55: #{bce_ranking_loss.1} parent=51 // pred_region
        %s732 = smul.u32 %s21, 256
        %v733 = vadd.s32 %v727, 128
        %v734 = vstv %s732
        %v735 = vadd.s32 %v734, %v727
        %v736 = vadd.s32 %v734, %v733
        %vm737 = vcmp.lt.s32.totalorder %v735, 512
        %vm738 = vcmp.lt.s32.totalorder %v736, 512
        %v740 = vlaneseq
        %v741 = vshrl.u32 %v740, 7
        %v742 = vsub.s32 0, %v741
        %v743 = vrot.slane %v725, %v742
        %v744 = vlaneseq
        %v745 = vshrl.u32 %v744, 7
        %v746 = vsub.s32 1, %v745
        %v747 = vrot.slane %v725, %v746
        %v750 = vsel %vm737, %v743, 0.0
        %v751 = vsel %vm738, %v747, 0.0
        %vm752 = vcmask 1040384
        %v753 = vsel %vm752, %v750, 0.0
        %v754 = vsel %vm752, %v751, 0.0
        %v755 = vadd.f32 %v753, %v754
        %756 = vadd.xlane.f32.xlu0 %v755
        %v757 = vpop.xlane.xlu0 %756
        %v758 = vrot.slane %v757, 4
        %v759 = vadd.f32 %v757, %v758
        %v760 = vrot.slane %v759, 2
        %v761 = vadd.f32 %v759, %v760
        %v762 = vrot.slane %v761, 1
        %v763 = vadd.f32 %v761, %v762
        %s764 = vtos %v763
        %vm765 = vcmp.eq.s32.totalorder %v727, 0
        %v766 = vstv %s764
        %v767 = vsel %vm765, %v766, 0.0
        %768 = vst [vmem:[%s340] sm:$0x1] %v767
      $region56: #{bce_ranking_loss.1} parent=51 // pred_fallthru
        _
      %p769 = scmp.ne.s32.totalorder %s21, 1
      // Predicated region
      $region57: #{bce_ranking_loss.1} parent=51 // pred_check
        %p770 = pneg %p769
      $region58: #{bce_ranking_loss.1} parent=51 // pred_check_branch
        %772 = sbr.rel (%p770) target = $region60
      $region59: #{bce_ranking_loss.1} parent=51 // pred_region
        %v774 = vlaneseq
        %v775 = vshrl.u32 %v774, 7
        %v776 = vsub.s32 0, %v775
        %v777 = vrot.slane %v725, %v776
        %v778 = vlaneseq
        %v779 = vshrl.u32 %v778, 7
        %v780 = vsub.s32 1, %v779
        %v781 = vrot.slane %v725, %v780
        %vm784 = vcmask 1040384
        %v785 = vsel %vm784, %v777, 0.0
        %v786 = vsel %vm784, %v781, 0.0
        %v787 = vadd.f32 %v785, %v786
        %788 = vadd.xlane.f32.xlu0 %v787
        %v789 = vpop.xlane.xlu0 %788
        %v790 = vrot.slane %v789, 4
        %v791 = vadd.f32 %v789, %v790
        %v792 = vrot.slane %v791, 2
        %v793 = vadd.f32 %v791, %v792
        %v794 = vrot.slane %v793, 1
        %v795 = vadd.f32 %v793, %v794
        %s796 = vtos %v795
        %vm797 = vcmp.eq.s32.totalorder %v727, 0
        %v798 = vstv %s796
        %v799 = vsel %vm797, %v798, 0.0
        %800 = vst [vmem:[%s340] sm:$0x1] %v799
      $region60: #{bce_ranking_loss.1} parent=51 // pred_fallthru
        _
      %p801 = scmp.lt.s32.totalorder %s21, 1
      %s802 = scalar_select %p801, %s21, 1
      %s803 = scalar_lea.vmem %s8, %s802
      // Predicated region
      $region61: #{bce_ranking_loss.1} parent=51 // pred_check
        %p804 = pneg %p222
      $region62: #{bce_ranking_loss.1} parent=51 // pred_check_branch
        %806 = sbr.rel (%p804) target = $region64
      $region63: #{bce_ranking_loss.1} parent=51 // pred_region
        _
      $region64: #{bce_ranking_loss.1} parent=51 // pred_fallthru
        _
    $region52: #{bce_ranking_loss.1} parent=5 // pred_fallthru
      _
    %p807 = scmp.le.s32.totalorder 2, %s16
    // Predicated region
    $region65: #{bce_ranking_loss.1} parent=5 // pred_check
      %p808 = pneg %p807
    $region66: #{bce_ranking_loss.1} parent=5 // pred_check_branch
      %810 = sbr.rel (%p808) target = $region68
    $region67: #{bce_ranking_loss.1} parent=5 // pred_region
      %s811 = ssub.s32 %s16, 2
      // Predicated region
      $region69: #{bce_ranking_loss.1} parent=67 // pred_check
        %p812 = pneg %p228
      $region70: #{bce_ranking_loss.1} parent=67 // pred_check_branch
        %814 = sbr.rel (%p812) target = $region72
      $region71: #{bce_ranking_loss.1} parent=67 // pred_region
        %p815 = scmp.lt.s32.totalorder %s22, 1
        %s816 = scalar_select %p815, %s22, 1
        %s817 = scalar_lea.vmem %s8, %s816
      $region72: #{bce_ranking_loss.1} parent=67 // pred_fallthru
        _
    $region68: #{bce_ranking_loss.1} parent=5 // pred_fallthru
      _
  $region6: #{bce_ranking_loss.1} parent=0 // loop_footer
    %s20 = sadd.s32 1, %s16
  $region7: #{bce_ranking_loss.1} parent=0 // loop_footer_branch
    %15 = sbr.rel target = $region3
  $region8: #{bce_ranking_loss.1} parent=0 // loop_exit
    _

</llo_original>
